<compile_context>
chip_gen: v6e
topology: v6e:2x2x1
jax: 0.10.0
libtpu: 0.0.40
codegen_flags: <defaults>
</compile_context>

<pallas_src>
from typing import NamedTuple

import jax
import jax.numpy as jnp
from jax.experimental import pallas as pl
from jax.experimental.pallas import tpu as pltpu


def _round_up(n: int, m: int) -> int:
    return ((n + m - 1) // m) * m


class RNN1Params(NamedTuple):
    w1x: jax.Array   # (In,  HHp)
    w1h: jax.Array   # (HHp, HHp)
    b1p: jax.Array   # (1,   HHp)
    w2p: jax.Array   # (HHp, Op)
    b2p: jax.Array   # (1,   Op)
    input_size: int
    hidden_sq: int
    output_size: int


def rnn1_fused_kernel(x_ref, h0_ref, w1x_ref, w1h_ref, b1_ref, w2_ref, b2_ref,
                      out_ref, hseq_ref, i2h_scr):
    """Whole sequence in one invocation: batched x-projection, serial recurrence,
    batched output head."""
    f32 = jnp.float32
    Bp = h0_ref.shape[0]
    TB = x_ref.shape[0]
    T = TB // Bp

    # ---- Stage 1 (batched, off the serial path): x @ W1x + b1 for all T. ----
    xproj = (
        jnp.dot(x_ref[...].astype(f32), w1x_ref[...].astype(f32),
                preferred_element_type=f32)
        + b1_ref[...].astype(f32)          # bias broadcast hoisted out of the loop
    )                                      # (T*Bp, HHp)

    # ---- Stage 2: the recurrence. Only h @ W1h + xproj[t] per step. ----------
    w1h = w1h_ref[...].astype(f32)         # read once, stays resident
    h = h0_ref[...].astype(f32)            # (Bp, HHp) f32 carry (one vreg)
    for t in range(T):                     # T small & static -> fully unrolled
        h = (
            jnp.dot(h, w1h, preferred_element_type=f32)
            + xproj[t * Bp:(t + 1) * Bp, :]
        )
        i2h_scr[pl.ds(t * Bp, Bp), :] = h

    # ---- Stage 3 (batched head, off the serial path): one matmul + logsoftmax.
    i2h_all = i2h_scr[...]                 # (T*Bp, HHp) f32
    logits = (
        jnp.dot(i2h_all, w2_ref[...].astype(f32), preferred_element_type=f32)
        + b2_ref[...].astype(f32)          # padded lanes carry big_neg -> exp()==0
    )
    m = jnp.max(logits, axis=-1, keepdims=True)
    lse = jnp.log(jnp.sum(jnp.exp(logits - m), axis=-1, keepdims=True)) + m

    out_ref[...] = (logits - lse).astype(out_ref.dtype)     # (T*Bp, Op)  lane-dense
    hseq_ref[...] = i2h_all.astype(hseq_ref.dtype)          # (T*Bp, HHp) lane-dense


def prepare_params(w1, b1, w2, b2, input_size):
    """One-time parameter prep: split W1 into x/h parts, pad to lane-dense widths.

    Weights are stored (in_features, out_features), i.e. PyTorch weight.T.
    Zero padding of weight rows/cols is exact; padded b2 lanes get a large
    negative (dtype-aware) value so they vanish under log-softmax.
    """
    In = int(input_size)
    HH = int(w1.shape[1])
    Out = int(w2.shape[1])
    assert w1.shape[0] == In + HH, "w1 must be ((input_size + HH), HH)"
    dtype = w1.dtype

    HHp = max(_round_up(HH, 128), 128)
    Op = max(_round_up(Out, 128), 128)
    big_neg = -0.25 * float(jnp.finfo(dtype).max)   # safe for f32/bf16/fp16

    w1x = jnp.zeros((In, HHp), dtype).at[:, :HH].set(w1[:In, :])
    w1h = jnp.zeros((HHp, HHp), dtype).at[:HH, :HH].set(w1[In:, :])
    b1p = jnp.zeros((1, HHp), dtype).at[0, :HH].set(b1)
    w2p = jnp.zeros((HHp, Op), dtype).at[:HH, :Out].set(w2)
    b2p = jnp.full((1, Op), big_neg, dtype=dtype).at[0, :Out].set(b2)

    return RNN1Params(w1x=w1x, w1h=w1h, b1p=b1p, w2p=w2p, b2p=b2p,
                      input_size=In, hidden_sq=HH, output_size=Out)


def rnn1_sequence(x_seq, h0, params: RNN1Params):
    """Run the RNN1 step for every t of x_seq inside one pallas_call.

    x_seq: (T, B, In)   h0: (B, HH)
    Returns (log_softmax_seq (T, B, Out), hidden_seq (T, B, HH)).
    """
    T, B, In = x_seq.shape
    assert In == params.input_size
    HH, Out = params.hidden_sq, params.output_size
    dtype = x_seq.dtype

    Bp = max(_round_up(B, 8), 8)          # sublane-dense batch
    HHp = params.w1h.shape[0]             # lane-dense hidden width (>=128)
    Op = params.w2p.shape[1]              # lane-dense output width (>=128)

    # Pad batch / hidden and flatten time into the sublane axis (2-D slabs).
    xp2d = (jnp.zeros((T, Bp, In), dtype).at[:, :B, :].set(x_seq)
            .reshape(T * Bp, In))
    h0p = jnp.zeros((Bp, HHp), dtype).at[:B, :HH].set(h0)

    itemsize = jnp.dtype(dtype).itemsize
    flops = 2 * T * Bp * (In * HHp + HHp * HHp + HHp * Op)
    transcendentals = T * Bp * (Op + 1)                     # exp + log
    bytes_accessed = itemsize * (
        xp2d.size + h0p.size + params.w1x.size + params.w1h.size
        + params.b1p.size + params.w2p.size + params.b2p.size
        + T * Bp * Op + T * Bp * HHp
    )

    vmem_spec = pl.BlockSpec(memory_space=pltpu.MemorySpace.VMEM)
    out2d, hseq2d = pl.pallas_call(
        rnn1_fused_kernel,
        out_shape=(
            jax.ShapeDtypeStruct((T * Bp, Op), dtype),    # per-step log-softmax
            jax.ShapeDtypeStruct((T * Bp, HHp), dtype),   # per-step hidden (i2h)
        ),
        in_specs=[vmem_spec] * 7,
        out_specs=(vmem_spec, vmem_spec),
        scratch_shapes=[pltpu.VMEM((T * Bp, HHp), jnp.float32)],  # i2h slab (f32)
        cost_estimate=pl.CostEstimate(
            flops=flops,
            transcendentals=transcendentals,
            bytes_accessed=bytes_accessed,
        ),
    )(xp2d, h0p, params.w1x, params.w1h, params.b1p, params.w2p, params.b2p)

    out = out2d.reshape(T, Bp, Op)[:, :B, :Out]
    hseq = hseq2d.reshape(T, Bp, HHp)[:, :B, :HH]
    return out, hseq


def rnn1_forward(x, hidden, params: RNN1Params):
    """Single-step forward, identical semantics to RNN1.forward(input, hidden)."""
    out_seq, h_seq = rnn1_sequence(x[None], hidden, params)
    return out_seq[0], h_seq[0]


def init_params(key, input_size, hidden_size, output_size, dtype=jnp.float32):
    HH = hidden_size * hidden_size
    k1, k2, k3, k4 = jax.random.split(key, 4)
    # PyTorch nn.Linear default: U(-1/sqrt(fan_in), 1/sqrt(fan_in))
    lim1 = 1.0 / float(jnp.sqrt(jnp.array(input_size + HH, jnp.float32)))
    lim2 = 1.0 / float(jnp.sqrt(jnp.array(HH, jnp.float32)))
    w1 = jax.random.uniform(k1, (input_size + HH, HH), dtype, -lim1, lim1)
    b1 = jax.random.uniform(k2, (HH,), dtype, -lim1, lim1)
    w2 = jax.random.uniform(k3, (HH, output_size), dtype, -lim2, lim2)
    b2 = jax.random.uniform(k4, (output_size,), dtype, -lim2, lim2)
    return w1, b1, w2, b2


if __name__ == "__main__":
    key = jax.random.PRNGKey(0)

    batch = 2
    input_size = 16
    hidden_size = 8            # hidden state vector length = 8*8 = 64
    output_size = 10
    seq_len = 8
    HH = hidden_size * hidden_size

    kx, kp = jax.random.split(key)
    x_seq = jax.random.normal(kx, (seq_len, batch, input_size), jnp.float32)
    h0 = jnp.zeros((batch, HH), jnp.float32)     # initHidden()

    w1, b1, w2, b2 = init_params(kp, input_size, hidden_size, output_size)
    params = prepare_params(w1, b1, w2, b2, input_size)   # one-time prep

    # Single step (module forward semantics) + full recurrence, one kernel each.
    out1, i2h1 = rnn1_forward(x_seq[0], h0, params)
    out_seq, h_seq = rnn1_sequence(x_seq, h0, params)
    jax.block_until_ready((out1, i2h1, out_seq, h_seq))

    # Plain-JAX reference (f32, highest matmul precision).
    def ref_step(x_t, h_t):
        combined = jnp.concatenate([x_t, h_t], axis=1)
        i2h = jnp.dot(combined, w1, precision=jax.lax.Precision.HIGHEST) + b1
        logits = jnp.dot(i2h, w2, precision=jax.lax.Precision.HIGHEST) + b2
        return jax.nn.log_softmax(logits, axis=1), i2h

    out1_ref, i2h1_ref = ref_step(x_seq[0], h0)
    assert jnp.allclose(out1, out1_ref, atol=2e-4, rtol=2e-4), "step output mismatch"
    assert jnp.allclose(i2h1, i2h1_ref, atol=2e-4, rtol=2e-4), "step i2h mismatch"

    h_t = h0
    outs_ref, hs_ref = [], []
    for t in range(seq_len):
        o_t, h_t = ref_step(x_seq[t], h_t)
        outs_ref.append(o_t)
        hs_ref.append(h_t)
    out_seq_ref = jnp.stack(outs_ref)
    h_seq_ref = jnp.stack(hs_ref)
    assert jnp.allclose(out_seq, out_seq_ref, atol=2e-4, rtol=2e-4), "seq output mismatch"
    assert jnp.allclose(h_seq, h_seq_ref, atol=2e-4, rtol=2e-4), "seq hidden mismatch"

    print("KERNEL_OK")
</pallas_src>

<mosaic_0001>
module attributes {stable_mosaic.version = 11 : i64} {
  func.func @rnn1_fused_kernel(%arg0: memref<8x16xf32, #tpu.memory_space<vmem>>, %arg1: memref<8x128xf32, #tpu.memory_space<vmem>>, %arg2: memref<16x128xf32, #tpu.memory_space<vmem>>, %arg3: memref<128x128xf32, #tpu.memory_space<vmem>>, %arg4: memref<1x128xf32, #tpu.memory_space<vmem>>, %arg5: memref<128x128xf32, #tpu.memory_space<vmem>>, %arg6: memref<1x128xf32, #tpu.memory_space<vmem>>, %arg7: memref<8x128xf32, #tpu.memory_space<vmem>>, %arg8: memref<8x128xf32, #tpu.memory_space<vmem>>, %arg9: memref<8x128xf32, #tpu.memory_space<vmem>>) attributes {dimension_semantics = [], scalar_prefetch = 0 : i64, scratch_operands = 1 : i64, tpu.core_type = #tpu.core_type<tc>} {
    %c0 = arith.constant 0 : index
    %c0_0 = arith.constant 0 : index
    %0 = vector.load %arg0[%c0, %c0_0] : memref<8x16xf32, #tpu.memory_space<vmem>>, vector<8x16xf32>
    %c0_1 = arith.constant 0 : index
    %c0_2 = arith.constant 0 : index
    %1 = vector.load %arg2[%c0_1, %c0_2] : memref<16x128xf32, #tpu.memory_space<vmem>>, vector<16x128xf32>
    %cst = arith.constant dense<0.000000e+00> : vector<8x128xf32>
    %2 = tpu.matmul %0, %1, %cst {dimension_numbers = #tpu.dot_dimension_numbers<[1], [0], [0], [1], [0, 0, 1, 1], [], []>} : vector<8x16xf32>, vector<16x128xf32>, vector<8x128xf32> -> vector<8x128xf32>
    %c0_3 = arith.constant 0 : index
    %c0_4 = arith.constant 0 : index
    %3 = vector.load %arg4[%c0_3, %c0_4] : memref<1x128xf32, #tpu.memory_space<vmem>>, vector<1x128xf32>
    %4 = vector.broadcast %3 : vector<1x128xf32> to vector<8x128xf32>
    %5 = arith.addf %2, %4 : vector<8x128xf32>
    %c0_5 = arith.constant 0 : index
    %c0_6 = arith.constant 0 : index
    %6 = vector.load %arg3[%c0_5, %c0_6] : memref<128x128xf32, #tpu.memory_space<vmem>>, vector<128x128xf32>
    %c0_7 = arith.constant 0 : index
    %c0_8 = arith.constant 0 : index
    %7 = vector.load %arg1[%c0_7, %c0_8] : memref<8x128xf32, #tpu.memory_space<vmem>>, vector<8x128xf32>
    %cst_9 = arith.constant dense<0.000000e+00> : vector<8x128xf32>
    %8 = tpu.matmul %7, %6, %cst_9 {dimension_numbers = #tpu.dot_dimension_numbers<[1], [0], [0], [1], [0, 0, 1, 1], [], []>} : vector<8x128xf32>, vector<128x128xf32>, vector<8x128xf32> -> vector<8x128xf32>
    %9 = arith.addf %8, %5 : vector<8x128xf32>
    %c0_10 = arith.constant 0 : index
    %c0_11 = arith.constant 0 : index
    %10 = vector.load %arg9[%c0_10, %c0_11] : memref<8x128xf32, #tpu.memory_space<vmem>>, vector<8x128xf32>
    tpu.vector_store %arg9[%c0_10, %c0_11], %9 {strides = array<i32>} : memref<8x128xf32, #tpu.memory_space<vmem>>, vector<8x128xf32>,
    %c0_12 = arith.constant 0 : index
    %c0_13 = arith.constant 0 : index
    %11 = vector.load %arg9[%c0_12, %c0_13] : memref<8x128xf32, #tpu.memory_space<vmem>>, vector<8x128xf32>
    %c0_14 = arith.constant 0 : index
    %c0_15 = arith.constant 0 : index
    %12 = vector.load %arg5[%c0_14, %c0_15] : memref<128x128xf32, #tpu.memory_space<vmem>>, vector<128x128xf32>
    %cst_16 = arith.constant dense<0.000000e+00> : vector<8x128xf32>
    %13 = tpu.matmul %11, %12, %cst_16 {dimension_numbers = #tpu.dot_dimension_numbers<[1], [0], [0], [1], [0, 0, 1, 1], [], []>} : vector<8x128xf32>, vector<128x128xf32>, vector<8x128xf32> -> vector<8x128xf32>
    %c0_17 = arith.constant 0 : index
    %c0_18 = arith.constant 0 : index
    %14 = vector.load %arg6[%c0_17, %c0_18] : memref<1x128xf32, #tpu.memory_space<vmem>>, vector<1x128xf32>
    %15 = vector.broadcast %14 : vector<1x128xf32> to vector<8x128xf32>
    %16 = arith.addf %13, %15 : vector<8x128xf32>
    %cst_19 = arith.constant dense<0xFF800000> : vector<8xf32>
    %17 = vector.multi_reduction <maximumf>, %16, %cst_19 [1] : vector<8x128xf32> to vector<8xf32>
    %18 = vector.shape_cast %17 : vector<8xf32> to vector<8x1xf32>
    %19 = vector.broadcast %18 : vector<8x1xf32> to vector<8x128xf32>
    %20 = arith.subf %16, %19 : vector<8x128xf32>
    %21 = math.exp %20 : vector<8x128xf32>
    %cst_20 = arith.constant dense<0.000000e+00> : vector<8xf32>
    %22 = vector.multi_reduction <add>, %21, %cst_20 [1] : vector<8x128xf32> to vector<8xf32>
    %23 = vector.shape_cast %22 : vector<8xf32> to vector<8x1xf32>
    %24 = math.log %23 : vector<8x1xf32>
    %25 = arith.addf %24, %18 : vector<8x1xf32>
    %26 = vector.broadcast %25 : vector<8x1xf32> to vector<8x128xf32>
    %27 = arith.subf %16, %26 : vector<8x128xf32>
    %c0_21 = arith.constant 0 : index
    %c0_22 = arith.constant 0 : index
    %28 = vector.load %arg7[%c0_21, %c0_22] : memref<8x128xf32, #tpu.memory_space<vmem>>, vector<8x128xf32>
    tpu.vector_store %arg7[%c0_21, %c0_22], %27 {strides = array<i32>} : memref<8x128xf32, #tpu.memory_space<vmem>>, vector<8x128xf32>,
    %c0_23 = arith.constant 0 : index
    %c0_24 = arith.constant 0 : index
    %29 = vector.load %arg8[%c0_23, %c0_24] : memref<8x128xf32, #tpu.memory_space<vmem>>, vector<8x128xf32>
    tpu.vector_store %arg8[%c0_23, %c0_24], %11 {strides = array<i32>} : memref<8x128xf32, #tpu.memory_space<vmem>>, vector<8x128xf32>,
    return
  }
}

</mosaic_0001>

<llo_original>
// kernel: tpu_custom_call.1
$region0: #{tpu_custom_call.1}
  #allocation0 [shape = 'u32[]', space=smem, size = 0x4, offset = 0x4, fixed_abs, tag = 'smem constant byte address 0x4 - core index']
  #allocation1 [shape = 'u32[144,128]{1,0:T(1,128)}', space=vmem, size = 0x12000, scoped, tag = 'internal scratch']
  #allocation2 [shape = 'f32[8,128]{1,0:T(8,128)}', space=vmem, size = 0x1000, scoped, tag = 'scratch operand']
  %s0 = inlined_call_operand.hbm [shape: f32[8,16], index: 0, kind: input, shape index: {}]
  %s1 = inlined_call_operand.hbm [shape: f32[8,128], index: 1, kind: input, shape index: {}]
  %s2 = inlined_call_operand.hbm [shape: f32[16,128], index: 2, kind: input, shape index: {}]
  %s3 = inlined_call_operand.hbm [shape: f32[128,128], index: 3, kind: input, shape index: {}]
  %s4 = inlined_call_operand.vmem [shape: f32[1,128], index: 4, kind: input, shape index: {}]
  %s5 = inlined_call_operand.hbm [shape: f32[128,128], index: 5, kind: input, shape index: {}]
  %s6 = inlined_call_operand.vmem [shape: f32[1,128], index: 6, kind: input, shape index: {}]
  %s7 = inlined_call_operand.hbm [shape: f32[8,128], index: 7, kind: output, shape index: {0}]
  %s8 = inlined_call_operand.hbm [shape: f32[8,128], index: 8, kind: output, shape index: {1}]
  %9 = xla_tuple %s7, %s8
  %s10 = sld [smem:[#allocation0]]
  $region66: #{tpu_custom_call.1} parent=0
    _
  %s12 = ssub.s32 1, %s10
  %s13 = scalar_select 0, %s12, %s10
  $region1: #{tpu_custom_call.1} parent=0
    #allocation3 [shape = 'u8[4096]{0}', space=vmem, size = 0x1000, scoped, tag = 'input window, operand 0, single buffered']
    #allocation4 [shape = 's32[1]{0}', space=sflag, size = 0x4, scoped, tag = 'scoped memory for tpu_custom_call.1']
    #allocation5 [shape = 's32[1]{0}', space=sflag, size = 0x4, scoped, tag = 'scoped memory for tpu_custom_call.1']
    #allocation6 [shape = 'u8[4096]{0}', space=vmem, size = 0x1000, scoped, tag = 'input window, operand 1, single buffered']
    #allocation7 [shape = 's32[1]{0}', space=sflag, size = 0x4, scoped, tag = 'scoped memory for tpu_custom_call.1']
    #allocation8 [shape = 'u8[8192]{0}', space=vmem, size = 0x2000, scoped, tag = 'input window, operand 2, single buffered']
    #allocation9 [shape = 'u8[65536]{0}', space=vmem, size = 0x10000, scoped, tag = 'input window, operand 3, single buffered']
    #allocation10 [shape = 's32[1]{0}', space=sflag, size = 0x4, scoped, tag = 'scoped memory for tpu_custom_call.1']
    #allocation11 [shape = 'u8[65536]{0}', space=vmem, size = 0x10000, scoped, tag = 'input window, operand 5, single buffered']
    #allocation12 [shape = 'u8[4096]{0}', space=vmem, size = 0x1000, scoped, tag = 'output window, operand 0, single buffered']
    #allocation13 [shape = 'u8[4096]{0}', space=vmem, size = 0x1000, scoped, tag = 'output window, operand 1, single buffered']
    #allocation14 [shape = 's32[1]{0}', space=sflag, size = 0x4, scoped, tag = 'scoped memory for tpu_custom_call.1']
    %14 = vsyncpa [#allocation4], 0
    %15 = vsyncpa [#allocation7], 0
    %16 = vsyncpa [#allocation10], 0
    %17 = vsyncpa [#allocation5], 0
    %18 = vsyncpa [#allocation14], 0
    // Predicated region
    $region2: #{tpu_custom_call.1} parent=1 // pred_check
      _
    $region3: #{tpu_custom_call.1} parent=1 // pred_check_branch
      %20 = sbr.rel (0) target = $region5
    $region4: #{tpu_custom_call.1} parent=1 // pred_region
      %s22 = ssub.s32 128, 128
      %23 = vsyncadd [#allocation4], %s22
      %s25 = sshll.u32 [#allocation3], 4
      %s26 = int_to_ptr.vmem [resolvable:$true] %s25
      %28 = dma.hbm_to_vmem [thread:$0]  %s0, 128, %s26, [#allocation4]
    $region5: #{tpu_custom_call.1} parent=1 // pred_fallthru
      _
    // Predicated region
    $region6: #{tpu_custom_call.1} parent=1 // pred_check
      _
    $region7: #{tpu_custom_call.1} parent=1 // pred_check_branch
      %30 = sbr.rel (0) target = $region9
    $region8: #{tpu_custom_call.1} parent=1 // pred_region
      %s32 = ssub.s32 128, 128
      %33 = vsyncadd [#allocation7], %s32
      %s35 = sshll.u32 [#allocation6], 4
      %s36 = int_to_ptr.vmem [resolvable:$true] %s35
      %38 = dma.hbm_to_vmem [thread:$0]  %s1, 128, %s36, [#allocation7]
    $region9: #{tpu_custom_call.1} parent=1 // pred_fallthru
      _
    // Predicated region
    $region10: #{tpu_custom_call.1} parent=1 // pred_check
      _
    $region11: #{tpu_custom_call.1} parent=1 // pred_check_branch
      %40 = sbr.rel (0) target = $region13
    $region12: #{tpu_custom_call.1} parent=1 // pred_region
      %s42 = ssub.s32 256, 256
      %43 = vsyncadd [#allocation7], %s42
      %s44 = sshll.u32 [#allocation8], 4
      %s45 = int_to_ptr.vmem [resolvable:$true] %s44
      %50 = dma.hbm_to_vmem [thread:$0]  %s2, 256, %s45, [#allocation7], 128, 128, 8
    $region13: #{tpu_custom_call.1} parent=1 // pred_fallthru
      _
    // Predicated region
    $region14: #{tpu_custom_call.1} parent=1 // pred_check
      _
    $region15: #{tpu_custom_call.1} parent=1 // pred_check_branch
      %52 = sbr.rel (0) target = $region17
    $region16: #{tpu_custom_call.1} parent=1 // pred_region
      %s54 = ssub.s32 2048, 2048
      %55 = vsyncadd [#allocation10], %s54
      %s56 = sshll.u32 [#allocation9], 4
      %s57 = int_to_ptr.vmem [resolvable:$true] %s56
      %62 = dma.hbm_to_vmem [thread:$0]  %s3, 2048, %s57, [#allocation10], 128, 128, 8
    $region17: #{tpu_custom_call.1} parent=1 // pred_fallthru
      _
    // Predicated region
    $region18: #{tpu_custom_call.1} parent=1 // pred_check
      _
    $region19: #{tpu_custom_call.1} parent=1 // pred_check_branch
      %64 = sbr.rel (0) target = $region21
    $region20: #{tpu_custom_call.1} parent=1 // pred_region
      _
    $region21: #{tpu_custom_call.1} parent=1 // pred_fallthru
      _
    // Predicated region
    $region22: #{tpu_custom_call.1} parent=1 // pred_check
      _
    $region23: #{tpu_custom_call.1} parent=1 // pred_check_branch
      %66 = sbr.rel (0) target = $region25
    $region24: #{tpu_custom_call.1} parent=1 // pred_region
      %s68 = ssub.s32 2048, 2048
      %69 = vsyncadd [#allocation10], %s68
      %s70 = sshll.u32 [#allocation11], 4
      %s71 = int_to_ptr.vmem [resolvable:$true] %s70
      %76 = dma.hbm_to_vmem [thread:$0]  %s5, 2048, %s71, [#allocation10], 128, 128, 8
    $region25: #{tpu_custom_call.1} parent=1 // pred_fallthru
      _
    // Predicated region
    $region26: #{tpu_custom_call.1} parent=1 // pred_check
      _
    $region27: #{tpu_custom_call.1} parent=1 // pred_check_branch
      %78 = sbr.rel (0) target = $region29
    $region28: #{tpu_custom_call.1} parent=1 // pred_region
      _
    $region29: #{tpu_custom_call.1} parent=1 // pred_fallthru
      _
    // Predicated region
    $region30: #{tpu_custom_call.1} parent=1 // pred_check
      _
    $region31: #{tpu_custom_call.1} parent=1 // pred_check_branch
      %80 = sbr.rel (0) target = $region33
    $region32: #{tpu_custom_call.1} parent=1 // pred_region
      %81 = dma.done [#allocation4], 128
    $region33: #{tpu_custom_call.1} parent=1 // pred_fallthru
      _
    // Predicated region
    $region34: #{tpu_custom_call.1} parent=1 // pred_check
      _
    $region35: #{tpu_custom_call.1} parent=1 // pred_check_branch
      %83 = sbr.rel (0) target = $region37
    $region36: #{tpu_custom_call.1} parent=1 // pred_region
      %84 = dma.done [#allocation7], 128
    $region37: #{tpu_custom_call.1} parent=1 // pred_fallthru
      _
    // Predicated region
    $region38: #{tpu_custom_call.1} parent=1 // pred_check
      _
    $region39: #{tpu_custom_call.1} parent=1 // pred_check_branch
      %86 = sbr.rel (0) target = $region41
    $region40: #{tpu_custom_call.1} parent=1 // pred_region
      %87 = dma.done [#allocation7], 256
    $region41: #{tpu_custom_call.1} parent=1 // pred_fallthru
      _
    // Predicated region
    $region42: #{tpu_custom_call.1} parent=1 // pred_check
      _
    $region43: #{tpu_custom_call.1} parent=1 // pred_check_branch
      %89 = sbr.rel (0) target = $region45
    $region44: #{tpu_custom_call.1} parent=1 // pred_region
      %90 = dma.done [#allocation10], 2048
    $region45: #{tpu_custom_call.1} parent=1 // pred_fallthru
      _
    // Predicated region
    $region46: #{tpu_custom_call.1} parent=1 // pred_check
      _
    $region47: #{tpu_custom_call.1} parent=1 // pred_check_branch
      %92 = sbr.rel (0) target = $region49
    $region48: #{tpu_custom_call.1} parent=1 // pred_region
      %93 = dma.done [#allocation10], 2048
    $region49: #{tpu_custom_call.1} parent=1 // pred_fallthru
      _
    %v94 = vld [vmem:[#allocation3] sm:$0xff]
    %v95 = vld [vmem:[#allocation8] sm:$0xff]
    %v96 = vld [vmem:[#allocation8 + $0x8] sm:$0xff]
    %v97 = vld [vmem:[%s4] sm:$0x1]
    %v99 = vlaneseq
    %v100 = vshrl.u32 %v99, 7
    %v101 = vsub.s32 0, %v100
    %v102 = vrot.slane %v97, %v101
    %vm104 = vcmask 130048
    %v106 = vsel %vm104, %v94, 0
    %108 = vmatprep.subr.mxu0 0.0
    %109 = vmatpush1.msra.mxu0 0.0
    %110 = vmatprep.subr.mxu0 0.0
    %111 = vmatpush1.msra.mxu0 0.0
    %112 = vmatprep.subr.mxu0 0.0
    %113 = vmatpush1.msra.mxu0 0.0
    %114 = vmatprep.subr.mxu0 0.0
    %115 = vmatpush1.msra.mxu0 0.0
    %116 = vmatprep.subr.mxu0 0.0
    %117 = vmatpush1.msra.mxu0 0.0
    %118 = vmatprep.subr.mxu0 0.0
    %119 = vmatpush1.msra.mxu0 0.0
    %120 = vmatprep.subr.mxu0 0.0
    %121 = vmatpush1.msra.mxu0 0.0
    %122 = vmatprep.subr.mxu0 0.0
    %123 = vmatpush1.msra.mxu0 0.0
    %124 = vmatprep.subr.mxu0 0.0
    %125 = vmatpush1.msra.mxu0 0.0
    %126 = vmatprep.subr.mxu0 0.0
    %127 = vmatpush1.msra.mxu0 0.0
    %128 = vmatprep.subr.mxu0 0.0
    %129 = vmatpush1.msra.mxu0 0.0
    %130 = vmatprep.subr.mxu0 0.0
    %131 = vmatpush1.msra.mxu0 0.0
    %132 = vmatprep.subr.mxu0 0.0
    %133 = vmatpush1.msra.mxu0 0.0
    %134 = vmatprep.subr.mxu0 0.0
    %135 = vmatpush1.msra.mxu0 0.0
    %136 = vmatprep.subr.mxu0 0.0
    %137 = vmatpush1.msra.mxu0 %v96
    %138 = vmatprep.subr.mxu0 0.0
    %139 = vmatpush1.msra.mxu0 %v95
    %140 = vmatprep.subr.mxu0 0.0
    %141 = vmatpush2.msra.mxu0 0.0
    %142 = vmatprep.subr.mxu0 0.0
    %143 = vmatpush2.msra.mxu0 0.0
    %144 = vmatprep.subr.mxu0 0.0
    %145 = vmatpush2.msra.mxu0 0.0
    %146 = vmatprep.subr.mxu0 0.0
    %147 = vmatpush2.msra.mxu0 0.0
    %148 = vmatprep.subr.mxu0 0.0
    %149 = vmatpush2.msra.mxu0 0.0
    %150 = vmatprep.subr.mxu0 0.0
    %151 = vmatpush2.msra.mxu0 0.0
    %152 = vmatprep.subr.mxu0 0.0
    %153 = vmatpush2.msra.mxu0 0.0
    %154 = vmatprep.subr.mxu0 0.0
    %155 = vmatpush2.msra.mxu0 0.0
    %156 = vmatprep.subr.mxu0 0.0
    %157 = vmatpush2.msra.mxu0 0.0
    %158 = vmatprep.subr.mxu0 0.0
    %159 = vmatpush2.msra.mxu0 0.0
    %160 = vmatprep.subr.mxu0 0.0
    %161 = vmatpush2.msra.mxu0 0.0
    %162 = vmatprep.subr.mxu0 0.0
    %163 = vmatpush2.msra.mxu0 0.0
    %164 = vmatprep.subr.mxu0 0.0
    %165 = vmatpush2.msra.mxu0 0.0
    %166 = vmatprep.subr.mxu0 0.0
    %167 = vmatpush2.msra.mxu0 0.0
    %168 = vmatprep.subr.mxu0 0.0
    %169 = vmatpush2.msra.mxu0 0.0
    %170 = vmatprep.subr.mxu0 0.0
    %171 = vmatpush2.msra.mxu0 0.0
    %172 = vmatprep.mubr.f32.mxu0 0.0
    %173 = vmatmul.mubr.f32.gmra.mxu0 %v106
    %v174 = vpop.f32.mrf.mxu0
    %v175 = vadd.f32 %v102, %v174
    %v176 = vpop.f32.mrf.mxu0
    %177 = vdwg.mxu0
    %v178 = vld [vmem:[#allocation9] sm:$0xff]
    %v179 = vld [vmem:[#allocation9 + $0x8] sm:$0xff]
    %v180 = vld [vmem:[#allocation9 + $0x10] sm:$0xff]
    %v181 = vld [vmem:[#allocation9 + $0x18] sm:$0xff]
    %v182 = vld [vmem:[#allocation9 + $0x20] sm:$0xff]
    %v183 = vld [vmem:[#allocation9 + $0x28] sm:$0xff]
    %v184 = vld [vmem:[#allocation9 + $0x30] sm:$0xff]
    %v185 = vld [vmem:[#allocation9 + $0x38] sm:$0xff]
    %v186 = vld [vmem:[#allocation9 + $0x40] sm:$0xff]
    %v187 = vld [vmem:[#allocation9 + $0x48] sm:$0xff]
    %v188 = vld [vmem:[#allocation9 + $0x50] sm:$0xff]
    %v189 = vld [vmem:[#allocation9 + $0x58] sm:$0xff]
    %v190 = vld [vmem:[#allocation9 + $0x60] sm:$0xff]
    %v191 = vld [vmem:[#allocation9 + $0x68] sm:$0xff]
    %v192 = vld [vmem:[#allocation9 + $0x70] sm:$0xff]
    %v193 = vld [vmem:[#allocation9 + $0x78] sm:$0xff]
    %v194 = vld [vmem:[#allocation6] sm:$0xff]
    %195 = vmatprep.subr.mxu0 0.0
    %196 = vmatpush1.msra.mxu0 %v193
    %197 = vmatprep.subr.mxu0 0.0
    %198 = vmatpush1.msra.mxu0 %v192
    %199 = vmatprep.subr.mxu0 0.0
    %200 = vmatpush1.msra.mxu0 %v191
    %201 = vmatprep.subr.mxu0 0.0
    %202 = vmatpush1.msra.mxu0 %v190
    %203 = vmatprep.subr.mxu0 0.0
    %204 = vmatpush1.msra.mxu0 %v189
    %205 = vmatprep.subr.mxu0 0.0
    %206 = vmatpush1.msra.mxu0 %v188
    %207 = vmatprep.subr.mxu0 0.0
    %208 = vmatpush1.msra.mxu0 %v187
    %209 = vmatprep.subr.mxu0 0.0
    %210 = vmatpush1.msra.mxu0 %v186
    %211 = vmatprep.subr.mxu0 0.0
    %212 = vmatpush1.msra.mxu0 %v185
    %213 = vmatprep.subr.mxu0 0.0
    %214 = vmatpush1.msra.mxu0 %v184
    %215 = vmatprep.subr.mxu0 0.0
    %216 = vmatpush1.msra.mxu0 %v183
    %217 = vmatprep.subr.mxu0 0.0
    %218 = vmatpush1.msra.mxu0 %v182
    %219 = vmatprep.subr.mxu0 0.0
    %220 = vmatpush1.msra.mxu0 %v181
    %221 = vmatprep.subr.mxu0 0.0
    %222 = vmatpush1.msra.mxu0 %v180
    %223 = vmatprep.subr.mxu0 0.0
    %224 = vmatpush1.msra.mxu0 %v179
    %225 = vmatprep.subr.mxu0 0.0
    %226 = vmatpush1.msra.mxu0 %v178
    %227 = vmatprep.subr.mxu0 0.0
    %228 = vmatpush2.msra.mxu0 0.0
    %229 = vmatprep.subr.mxu0 0.0
    %230 = vmatpush2.msra.mxu0 0.0
    %231 = vmatprep.subr.mxu0 0.0
    %232 = vmatpush2.msra.mxu0 0.0
    %233 = vmatprep.subr.mxu0 0.0
    %234 = vmatpush2.msra.mxu0 0.0
    %235 = vmatprep.subr.mxu0 0.0
    %236 = vmatpush2.msra.mxu0 0.0
    %237 = vmatprep.subr.mxu0 0.0
    %238 = vmatpush2.msra.mxu0 0.0
    %239 = vmatprep.subr.mxu0 0.0
    %240 = vmatpush2.msra.mxu0 0.0
    %241 = vmatprep.subr.mxu0 0.0
    %242 = vmatpush2.msra.mxu0 0.0
    %243 = vmatprep.subr.mxu0 0.0
    %244 = vmatpush2.msra.mxu0 0.0
    %245 = vmatprep.subr.mxu0 0.0
    %246 = vmatpush2.msra.mxu0 0.0
    %247 = vmatprep.subr.mxu0 0.0
    %248 = vmatpush2.msra.mxu0 0.0
    %249 = vmatprep.subr.mxu0 0.0
    %250 = vmatpush2.msra.mxu0 0.0
    %251 = vmatprep.subr.mxu0 0.0
    %252 = vmatpush2.msra.mxu0 0.0
    %253 = vmatprep.subr.mxu0 0.0
    %254 = vmatpush2.msra.mxu0 0.0
    %255 = vmatprep.subr.mxu0 0.0
    %256 = vmatpush2.msra.mxu0 0.0
    %257 = vmatprep.subr.mxu0 0.0
    %258 = vmatpush2.msra.mxu0 0.0
    %259 = vmatprep.mubr.f32.mxu0 0.0
    %260 = vmatmul.mubr.f32.gmra.mxu0 %v194
    %v261 = vpop.f32.mrf.mxu0
    %v262 = vadd.f32 %v175, %v261
    %v263 = vpop.f32.mrf.mxu0
    %264 = vdwg.mxu0
    %265 = vst [vmem:[#allocation2] sm:$0xff] %v262
    %v266 = vld [vmem:[#allocation2] sm:$0xff]
    %v267 = vld [vmem:[#allocation11] sm:$0xff]
    %v268 = vld [vmem:[#allocation11 + $0x8] sm:$0xff]
    %v269 = vld [vmem:[#allocation11 + $0x10] sm:$0xff]
    %v270 = vld [vmem:[#allocation11 + $0x18] sm:$0xff]
    %v271 = vld [vmem:[#allocation11 + $0x20] sm:$0xff]
    %v272 = vld [vmem:[#allocation11 + $0x28] sm:$0xff]
    %v273 = vld [vmem:[#allocation11 + $0x30] sm:$0xff]
    %v274 = vld [vmem:[#allocation11 + $0x38] sm:$0xff]
    %v275 = vld [vmem:[#allocation11 + $0x40] sm:$0xff]
    %v276 = vld [vmem:[#allocation11 + $0x48] sm:$0xff]
    %v277 = vld [vmem:[#allocation11 + $0x50] sm:$0xff]
    %v278 = vld [vmem:[#allocation11 + $0x58] sm:$0xff]
    %v279 = vld [vmem:[#allocation11 + $0x60] sm:$0xff]
    %v280 = vld [vmem:[#allocation11 + $0x68] sm:$0xff]
    %v281 = vld [vmem:[#allocation11 + $0x70] sm:$0xff]
    %v282 = vld [vmem:[#allocation11 + $0x78] sm:$0xff]
    %v283 = vld [vmem:[%s6] sm:$0x1]
    %v285 = vlaneseq
    %v286 = vshrl.u32 %v285, 7
    %v287 = vsub.s32 0, %v286
    %v288 = vrot.slane %v283, %v287
    %290 = vmatprep.subr.mxu0 0.0
    %291 = vmatpush1.msra.mxu0 %v282
    %292 = vmatprep.subr.mxu0 0.0
    %293 = vmatpush1.msra.mxu0 %v281
    %294 = vmatprep.subr.mxu0 0.0
    %295 = vmatpush1.msra.mxu0 %v280
    %296 = vmatprep.subr.mxu0 0.0
    %297 = vmatpush1.msra.mxu0 %v279
    %298 = vmatprep.subr.mxu0 0.0
    %299 = vmatpush1.msra.mxu0 %v278
    %300 = vmatprep.subr.mxu0 0.0
    %301 = vmatpush1.msra.mxu0 %v277
    %302 = vmatprep.subr.mxu0 0.0
    %303 = vmatpush1.msra.mxu0 %v276
    %304 = vmatprep.subr.mxu0 0.0
    %305 = vmatpush1.msra.mxu0 %v275
    %306 = vmatprep.subr.mxu0 0.0
    %307 = vmatpush1.msra.mxu0 %v274
    %308 = vmatprep.subr.mxu0 0.0
    %309 = vmatpush1.msra.mxu0 %v273
    %310 = vmatprep.subr.mxu0 0.0
    %311 = vmatpush1.msra.mxu0 %v272
    %312 = vmatprep.subr.mxu0 0.0
    %313 = vmatpush1.msra.mxu0 %v271
    %314 = vmatprep.subr.mxu0 0.0
    %315 = vmatpush1.msra.mxu0 %v270
    %316 = vmatprep.subr.mxu0 0.0
    %317 = vmatpush1.msra.mxu0 %v269
    %318 = vmatprep.subr.mxu0 0.0
    %319 = vmatpush1.msra.mxu0 %v268
    %320 = vmatprep.subr.mxu0 0.0
    %321 = vmatpush1.msra.mxu0 %v267
    %322 = vmatprep.subr.mxu0 0.0
    %323 = vmatpush2.msra.mxu0 0.0
    %324 = vmatprep.subr.mxu0 0.0
    %325 = vmatpush2.msra.mxu0 0.0
    %326 = vmatprep.subr.mxu0 0.0
    %327 = vmatpush2.msra.mxu0 0.0
    %328 = vmatprep.subr.mxu0 0.0
    %329 = vmatpush2.msra.mxu0 0.0
    %330 = vmatprep.subr.mxu0 0.0
    %331 = vmatpush2.msra.mxu0 0.0
    %332 = vmatprep.subr.mxu0 0.0
    %333 = vmatpush2.msra.mxu0 0.0
    %334 = vmatprep.subr.mxu0 0.0
    %335 = vmatpush2.msra.mxu0 0.0
    %336 = vmatprep.subr.mxu0 0.0
    %337 = vmatpush2.msra.mxu0 0.0
    %338 = vmatprep.subr.mxu0 0.0
    %339 = vmatpush2.msra.mxu0 0.0
    %340 = vmatprep.subr.mxu0 0.0
    %341 = vmatpush2.msra.mxu0 0.0
    %342 = vmatprep.subr.mxu0 0.0
    %343 = vmatpush2.msra.mxu0 0.0
    %344 = vmatprep.subr.mxu0 0.0
    %345 = vmatpush2.msra.mxu0 0.0
    %346 = vmatprep.subr.mxu0 0.0
    %347 = vmatpush2.msra.mxu0 0.0
    %348 = vmatprep.subr.mxu0 0.0
    %349 = vmatpush2.msra.mxu0 0.0
    %350 = vmatprep.subr.mxu0 0.0
    %351 = vmatpush2.msra.mxu0 0.0
    %352 = vmatprep.subr.mxu0 0.0
    %353 = vmatpush2.msra.mxu0 0.0
    %354 = vmatprep.mubr.f32.mxu0 0.0
    %355 = vmatmul.mubr.f32.gmra.mxu0 %v266
    %v356 = vpop.f32.mrf.mxu0
    %v357 = vadd.f32 %v288, %v356
    %v358 = vpop.f32.mrf.mxu0
    %359 = vdwg.mxu0
    %360 = vmax.xlane.f32.xlu0 %v357
    %v361 = vpop.xlane.xlu0 %360
    %v362 = vsub.f32 %v357, %v361
    %v363 = vmul.f32 %v362, 1.442695
    %v364 = vpow.pop %v363
    %365 = vadd.xlane.f32.xlu0 %v364
    %v366 = vpop.xlane.xlu0 %365
    %v367 = vlog2.pop %v366
    %v368 = vmul.f32 %v367, 0.6931472
    %v369 = vadd.f32 %v368, %v361
    %v370 = vsub.f32 %v357, %v369
    %371 = vst [vmem:[#allocation12] sm:$0xff] %v370
    %372 = vst [vmem:[#allocation13] sm:$0xff] %v266
    // Predicated region
    $region50: #{tpu_custom_call.1} parent=1 // pred_check
      _
    $region51: #{tpu_custom_call.1} parent=1 // pred_check_branch
      %374 = sbr.rel (0) target = $region53
    $region52: #{tpu_custom_call.1} parent=1 // pred_region
      %s376 = ssub.s32 128, 128
      %377 = vsyncadd [#allocation5], %s376
      %s379 = sshll.u32 [#allocation12], 4
      %s380 = int_to_ptr.vmem [resolvable:$true] %s379
      %382 = dma.vmem_to_hbm [thread:$0]  %s380, 128, %s7, [#allocation5]
    $region53: #{tpu_custom_call.1} parent=1 // pred_fallthru
      _
    // Predicated region
    $region54: #{tpu_custom_call.1} parent=1 // pred_check
      _
    $region55: #{tpu_custom_call.1} parent=1 // pred_check_branch
      %384 = sbr.rel (0) target = $region57
    $region56: #{tpu_custom_call.1} parent=1 // pred_region
      %s386 = ssub.s32 128, 128
      %387 = vsyncadd [#allocation14], %s386
      %s389 = sshll.u32 [#allocation13], 4
      %s390 = int_to_ptr.vmem [resolvable:$true] %s389
      %392 = dma.vmem_to_hbm [thread:$0]  %s390, 128, %s8, [#allocation14]
    $region57: #{tpu_custom_call.1} parent=1 // pred_fallthru
      _
    // Predicated region
    $region58: #{tpu_custom_call.1} parent=1 // pred_check
      _
    $region59: #{tpu_custom_call.1} parent=1 // pred_check_branch
      %394 = sbr.rel (0) target = $region61
    $region60: #{tpu_custom_call.1} parent=1 // pred_region
      %395 = dma.done [#allocation5], 128
    $region61: #{tpu_custom_call.1} parent=1 // pred_fallthru
      _
    // Predicated region
    $region62: #{tpu_custom_call.1} parent=1 // pred_check
      _
    $region63: #{tpu_custom_call.1} parent=1 // pred_check_branch
      %397 = sbr.rel (0) target = $region65
    $region64: #{tpu_custom_call.1} parent=1 // pred_region
      %398 = dma.done [#allocation14], 128
    $region65: #{tpu_custom_call.1} parent=1 // pred_fallthru
      _
    %399 = vsyncpa [#allocation4], 1
    %400 = vsyncpa [#allocation7], 1
    %401 = vsyncpa [#allocation10], 1
    %402 = vsyncpa [#allocation5], 1
    %403 = vsyncpa [#allocation14], 1

</llo_original>
